<compile_context>
chip_gen: v5e
topology: v5e:2x2
jax: 0.10.0
libtpu: 0.0.40
codegen_flags: <defaults>
</compile_context>

<pallas_src>
import math

import jax
import jax.numpy as jnp
from jax import lax
from jax.experimental import pallas as pl
from jax.experimental.pallas import tpu as pltpu


def _round_up(a: int, b: int) -> int:
    return ((a + b - 1) // b) * b


# ---- Path A: node table resident in VMEM, in-kernel one-hot gather --------
def _edge_emb_resident_kernel(idx_ref, ea_ref, x_ref, w_ref, b_ref, out_ref):
    # idx_ref : (2, TE) int32   row 0 = edge_index[1] (i), row 1 = edge_index[0] (j)
    #                           (order is irrelevant — both endpoints are summed)
    # ea_ref  : (TE, R)         edge RBF features for this tile
    # x_ref   : (Np, H)         zero-padded node features (resident, same block
    #                           every grid step)
    # w_ref   : (R, H)          Linear weight, already transposed (W.T)
    # b_ref   : (1, H)          Linear bias
    # out_ref : (TE, H)
    n_pad = x_ref.shape[0]
    te = out_ref.shape[0]

    idx = idx_ref[...]                                          # (2, TE)
    iota_n = lax.broadcasted_iota(jnp.int32, (n_pad, te), 0)    # node id per row
    # Transposed one-hot: column e has a 1 in rows idx[0,e] and idx[1,e]
    # (a 2 on self loops), so onehot_t^T @ x == x_i + x_j exactly.
    # 0/1/2 are exact in bf16 too.
    onehot_t = ((idx[0:1, :] == iota_n).astype(x_ref.dtype)
                + (idx[1:2, :] == iota_n).astype(x_ref.dtype))  # (Np, TE)
    # Contract over the node axis (dim 0 of both operands) on the MXU.
    x_sum = lax.dot_general(onehot_t, x_ref[...],
                            (((0,), (0,)), ((), ())),
                            preferred_element_type=jnp.float32)  # (TE, H)

    proj = jnp.dot(ea_ref[...], w_ref[...],
                   preferred_element_type=jnp.float32) + b_ref[...]
    out_ref[...] = (x_sum * proj).astype(out_ref.dtype)


# ---- Path B: fallback, single pre-summed node-feature stream --------------
def _edge_emb_streamed_kernel(xs_ref, ea_ref, w_ref, b_ref, out_ref):
    # xs_ref : (TE, H)  x[edge_index[1]] + x[edge_index[0]] (computed in XLA)
    proj = jnp.dot(ea_ref[...], w_ref[...],
                   preferred_element_type=jnp.float32) + b_ref[...]
    out_ref[...] = (xs_ref[...].astype(jnp.float32) * proj).astype(out_ref.dtype)


def edge_embedding(edge_index, edge_attr, x, weight, bias, *, tile_e=1024,
                   max_resident_nodes=2048,
                   max_resident_bytes=8 * 1024 * 1024,
                   tile_vmem_budget=8 * 1024 * 1024):
    """EdgeEmbedding forward.

    edge_index : int [2, E]
    edge_attr  : f32/bf16 [E, R]
    x          : f32/bf16 [N, H]
    weight     : f32 [H, R]   (PyTorch Linear.weight layout)
    bias       : f32 [H]
    returns    : [E, H] with edge_attr's dtype
    """
    E, R = edge_attr.shape
    N, H = x.shape
    out_dtype = edge_attr.dtype

    ea_bytes = edge_attr.dtype.itemsize
    out_bytes = jnp.dtype(out_dtype).itemsize
    x_bytes = x.dtype.itemsize

    # Decide whether the node table fits comfortably in VMEM.
    N_pad = _round_up(max(N, 1), 128)
    use_resident = (N_pad <= max_resident_nodes
                    and N_pad * H * x_bytes <= max_resident_bytes)

    # Edge-tile size: big (amortize the ~0.35us per-grid-step overhead) but
    # clamped so the double-buffered streaming tiles stay within budget, and
    # always a multiple of 128 so blocks are (8,128)-legal.
    per_row = R * ea_bytes + H * out_bytes + (8 if use_resident else H * x_bytes)
    max_rows = max(128, (tile_vmem_budget // (2 * per_row)) // 128 * 128)
    tile_e = _round_up(
        max(1, min(int(tile_e), max_rows, _round_up(E, 128))), 128)
    E_pad = _round_up(E, tile_e)
    grid = (E_pad // tile_e,)

    w_t = weight.T                    # [R, H]  (resident)
    b2 = bias.reshape(1, H)           # [1, H]  (resident)

    ea = edge_attr
    if E_pad != E:
        ea = jnp.pad(ea, ((0, E_pad - E), (0, 0)))

    flops = 2 * E_pad * R * H + 2 * E_pad * H
    bytes_accessed = (E_pad * (R * ea_bytes + H * out_bytes)
                      + R * H * weight.dtype.itemsize + H * bias.dtype.itemsize)
    if use_resident:
        flops += 2 * E_pad * N_pad * H
        bytes_accessed += E_pad * 2 * 4 + N_pad * H * x_bytes
    else:
        bytes_accessed += E_pad * H * x_bytes
    cost = pl.CostEstimate(flops=flops, transcendentals=0,
                           bytes_accessed=bytes_accessed)

    compiler_params = pltpu.CompilerParams(dimension_semantics=("parallel",))

    if use_resident:
        # ---- Path A: in-kernel gather against a VMEM-resident node table.
        x_pad = x if N_pad == N else jnp.pad(x, ((0, N_pad - N), (0, 0)))
        # Raw (2, E) indices, streamed as-is (no stack/transpose in XLA).
        idx = edge_index.astype(jnp.int32)
        if E_pad != E:
            idx = jnp.pad(idx, ((0, 0), (0, E_pad - E)))   # node 0: in-bounds

        out = pl.pallas_call(
            _edge_emb_resident_kernel,
            out_shape=jax.ShapeDtypeStruct((E_pad, H), out_dtype),
            grid_spec=pltpu.PrefetchScalarGridSpec(
                num_scalar_prefetch=0,
                grid=grid,
                in_specs=[
                    pl.BlockSpec((2, tile_e), lambda i: (0, i)),   # edge indices
                    pl.BlockSpec((tile_e, R), lambda i: (i, 0)),   # edge_attr
                    pl.BlockSpec((N_pad, H), lambda i: (0, 0)),    # x (resident)
                    pl.BlockSpec((R, H), lambda i: (0, 0)),        # W.T (resident)
                    pl.BlockSpec((1, H), lambda i: (0, 0)),        # bias (resident)
                ],
                out_specs=pl.BlockSpec((tile_e, H), lambda i: (i, 0)),
            ),
            compiler_params=compiler_params,
            cost_estimate=cost,
        )(idx, ea, x_pad, w_t, b2)
    else:
        # ---- Path B: fused gather+add in XLA; single [E,H] stream into the
        # kernel instead of two.
        x_sum = x[edge_index[1]] + x[edge_index[0]]        # [E, H]
        if E_pad != E:
            x_sum = jnp.pad(x_sum, ((0, E_pad - E), (0, 0)))

        out = pl.pallas_call(
            _edge_emb_streamed_kernel,
            out_shape=jax.ShapeDtypeStruct((E_pad, H), out_dtype),
            grid_spec=pltpu.PrefetchScalarGridSpec(
                num_scalar_prefetch=0,
                grid=grid,
                in_specs=[
                    pl.BlockSpec((tile_e, H), lambda i: (i, 0)),   # x_i + x_j
                    pl.BlockSpec((tile_e, R), lambda i: (i, 0)),   # edge_attr
                    pl.BlockSpec((R, H), lambda i: (0, 0)),        # W.T (resident)
                    pl.BlockSpec((1, H), lambda i: (0, 0)),        # bias (resident)
                ],
                out_specs=pl.BlockSpec((tile_e, H), lambda i: (i, 0)),
            ),
            compiler_params=compiler_params,
            cost_estimate=cost,
        )(x_sum, ea, w_t, b2)

    return out[:E]


def xavier_uniform(key, fan_out, fan_in, dtype=jnp.float32):
    limit = math.sqrt(6.0 / (fan_in + fan_out))
    return jax.random.uniform(key, (fan_out, fan_in), dtype,
                              minval=-limit, maxval=limit)


if __name__ == "__main__":
    key = jax.random.PRNGKey(0)
    k_x, k_ea, k_ei, k_w = jax.random.split(key, 4)

    num_nodes = 16
    num_edges = 200          # deliberately NOT a multiple of the tile size
    num_rbf = 32
    hidden_channels = 128

    x = jax.random.normal(k_x, (num_nodes, hidden_channels), jnp.float32)
    edge_attr = jax.random.normal(k_ea, (num_edges, num_rbf), jnp.float32)
    edge_index = jax.random.randint(k_ei, (2, num_edges), 0, num_nodes,
                                    dtype=jnp.int32)

    # Deterministic parameters matching reset_parameters():
    #   xavier_uniform_ on weight [hidden, num_rbf], zero bias.
    weight = xavier_uniform(k_w, hidden_channels, num_rbf)
    bias = jnp.zeros((hidden_channels,), jnp.float32)

    # Plain-JAX reference.
    x_j = x[edge_index[0]]
    x_i = x[edge_index[1]]
    ref = (x_i + x_j) * (edge_attr @ weight.T + bias)

    # Path A: VMEM-resident node table + in-kernel one-hot gather.
    # tile_e=128 here just so the tiny demo exercises a multi-step grid
    # (grid = 2) and the padded tail; production default is 1024.
    out_a = edge_embedding(edge_index, edge_attr, x, weight, bias, tile_e=128)
    out_a = jax.block_until_ready(out_a)
    assert out_a.shape == (num_edges, hidden_channels)
    assert jnp.allclose(out_a, ref, atol=1e-4, rtol=1e-4)

    # Path B: fallback with a single pre-summed [E,H] stream.
    out_b = edge_embedding(edge_index, edge_attr, x, weight, bias, tile_e=128,
                           max_resident_nodes=0)
    out_b = jax.block_until_ready(out_b)
    assert jnp.allclose(out_b, ref, atol=1e-4, rtol=1e-4)

    print("KERNEL_OK")
</pallas_src>

<mosaic_0001>
module attributes {stable_mosaic.version = 11 : i64} {
  func.func @_edge_emb_resident_kernel(%arg0: i32, %arg1: memref<2x128xi32, #tpu.memory_space<vmem>>, %arg2: memref<128x32xf32, #tpu.memory_space<vmem>>, %arg3: memref<128x128xf32, #tpu.memory_space<vmem>>, %arg4: memref<32x128xf32, #tpu.memory_space<vmem>>, %arg5: memref<1x128xf32, #tpu.memory_space<vmem>>, %arg6: memref<128x128xf32, #tpu.memory_space<vmem>>) attributes {dimension_semantics = [#tpu.dimension_semantics<parallel>], iteration_bounds = array<i64: 2>, scalar_prefetch = 0 : i64, scratch_operands = 0 : i64, tpu.core_type = #tpu.core_type<tc>, window_params = [{transform_indices = @transform_0, window_bounds = array<i64: 2, 128>}, {transform_indices = @transform_1, window_bounds = array<i64: 128, 32>}, {pipeline_mode = #tpu.pipeline_mode<synchronous>, transform_indices = @transform_2, window_bounds = array<i64: 128, 128>}, {pipeline_mode = #tpu.pipeline_mode<synchronous>, transform_indices = @transform_3, window_bounds = array<i64: 32, 128>}, {pipeline_mode = #tpu.pipeline_mode<synchronous>, transform_indices = @transform_4, window_bounds = array<i64: 1, 128>}, {transform_indices = @transform_5, window_bounds = array<i64: 128, 128>}]} {
    %c0 = arith.constant 0 : index
    %c0_0 = arith.constant 0 : index
    %0 = vector.load %arg1[%c0, %c0_0] : memref<2x128xi32, #tpu.memory_space<vmem>>, vector<2x128xi32>
    %1 = tpu.iota {dimensions = array<i32: 0>} : vector<128x128xi32>
    %2 = vector.extract_strided_slice %0 {offsets = [0, 0], sizes = [1, 128], strides = [1, 1]} : vector<2x128xi32> to vector<1x128xi32>
    %3 = vector.broadcast %2 : vector<1x128xi32> to vector<128x128xi32>
    %4 = arith.cmpi eq, %3, %1 : vector<128x128xi32>
    %5 = arith.extui %4 : vector<128x128xi1> to vector<128x128xi32>
    %6 = arith.sitofp %5 : vector<128x128xi32> to vector<128x128xf32>
    %7 = vector.extract_strided_slice %0 {offsets = [1, 0], sizes = [1, 128], strides = [1, 1]} : vector<2x128xi32> to vector<1x128xi32>
    %8 = vector.broadcast %7 : vector<1x128xi32> to vector<128x128xi32>
    %9 = arith.cmpi eq, %8, %1 : vector<128x128xi32>
    %10 = arith.extui %9 : vector<128x128xi1> to vector<128x128xi32>
    %11 = arith.sitofp %10 : vector<128x128xi32> to vector<128x128xf32>
    %12 = arith.addf %6, %11 : vector<128x128xf32>
    %c0_1 = arith.constant 0 : index
    %c0_2 = arith.constant 0 : index
    %13 = vector.load %arg3[%c0_1, %c0_2] : memref<128x128xf32, #tpu.memory_space<vmem>>, vector<128x128xf32>
    %cst = arith.constant dense<0.000000e+00> : vector<128x128xf32>
    %14 = tpu.matmul %12, %13, %cst {dimension_numbers = #tpu.dot_dimension_numbers<[0], [0], [1], [1], [0, 1, 1, 1], [], []>} : vector<128x128xf32>, vector<128x128xf32>, vector<128x128xf32> -> vector<128x128xf32>
    %c0_3 = arith.constant 0 : index
    %c0_4 = arith.constant 0 : index
    %15 = vector.load %arg2[%c0_3, %c0_4] : memref<128x32xf32, #tpu.memory_space<vmem>>, vector<128x32xf32>
    %c0_5 = arith.constant 0 : index
    %c0_6 = arith.constant 0 : index
    %16 = vector.load %arg4[%c0_5, %c0_6] : memref<32x128xf32, #tpu.memory_space<vmem>>, vector<32x128xf32>
    %cst_7 = arith.constant dense<0.000000e+00> : vector<128x128xf32>
    %17 = tpu.matmul %15, %16, %cst_7 {dimension_numbers = #tpu.dot_dimension_numbers<[1], [0], [0], [1], [0, 0, 1, 1], [], []>} : vector<128x32xf32>, vector<32x128xf32>, vector<128x128xf32> -> vector<128x128xf32>
    %c0_8 = arith.constant 0 : index
    %c0_9 = arith.constant 0 : index
    %18 = vector.load %arg5[%c0_8, %c0_9] : memref<1x128xf32, #tpu.memory_space<vmem>>, vector<1x128xf32>
    %19 = vector.broadcast %18 : vector<1x128xf32> to vector<128x128xf32>
    %20 = arith.addf %17, %19 : vector<128x128xf32>
    %21 = arith.mulf %14, %20 : vector<128x128xf32>
    %c0_10 = arith.constant 0 : index
    %c0_11 = arith.constant 0 : index
    %22 = vector.load %arg6[%c0_10, %c0_11] : memref<128x128xf32, #tpu.memory_space<vmem>>, vector<128x128xf32>
    tpu.vector_store %arg6[%c0_10, %c0_11], %21 {strides = array<i32>} : memref<128x128xf32, #tpu.memory_space<vmem>>, vector<128x128xf32>,
    return
  }
  func.func @transform_0(%arg0: i32) -> (i32, i32) {
    %c0_i32 = arith.constant 0 : i32
    %c0_i32_0 = arith.constant 0 : i32
    return %c0_i32, %arg0 : i32, i32
  }
  func.func @transform_1(%arg0: i32) -> (i32, i32) {
    %c0_i32 = arith.constant 0 : i32
    %c0_i32_0 = arith.constant 0 : i32
    return %arg0, %c0_i32 : i32, i32
  }
  func.func @transform_2(%arg0: i32) -> (i32, i32) {
    %c0_i32 = arith.constant 0 : i32
    %c0_i32_0 = arith.constant 0 : i32
    %c0_i32_1 = arith.constant 0 : i32
    return %c0_i32, %c0_i32_0 : i32, i32
  }
  func.func @transform_3(%arg0: i32) -> (i32, i32) {
    %c0_i32 = arith.constant 0 : i32
    %c0_i32_0 = arith.constant 0 : i32
    %c0_i32_1 = arith.constant 0 : i32
    return %c0_i32, %c0_i32_0 : i32, i32
  }
  func.func @transform_4(%arg0: i32) -> (i32, i32) {
    %c0_i32 = arith.constant 0 : i32
    %c0_i32_0 = arith.constant 0 : i32
    %c0_i32_1 = arith.constant 0 : i32
    return %c0_i32, %c0_i32_0 : i32, i32
  }
  func.func @transform_5(%arg0: i32) -> (i32, i32) {
    %c0_i32 = arith.constant 0 : i32
    %c0_i32_0 = arith.constant 0 : i32
    return %arg0, %c0_i32 : i32, i32
  }
}

</mosaic_0001>

<llo_original>
// kernel: tpu_custom_call.1
$region0: #{tpu_custom_call.1}
  #allocation0 [shape = 'u32[]', space=smem, size = 0x4, offset = 0x4, fixed_abs, tag = 'smem constant byte address 0x4 - core index']
  #allocation1 [shape = 'u32[72,128]{1,0:T(1,128)}', space=vmem, size = 0x9000, scoped, tag = 'internal scratch']
  %s0 = inlined_call_operand.vmem [shape: s32[2,256], index: 0, kind: input, shape index: {}]
  %s1 = inlined_call_operand.vmem [shape: f32[256,32], index: 1, kind: input, shape index: {}]
  %s2 = inlined_call_operand.vmem [shape: f32[128,128], index: 2, kind: input, shape index: {}]
  %s3 = inlined_call_operand.vmem [shape: f32[32,128], index: 3, kind: input, shape index: {}]
  %s4 = inlined_call_operand.vmem [shape: f32[1,128], index: 4, kind: input, shape index: {}]
  %s5 = inlined_call_operand.hbm [shape: f32[256,128], index: 5, kind: output, shape index: {}]
  %s6 = sld [smem:[#allocation0]]
  $region53: #{tpu_custom_call.1} parent=0
    _
  %s8 = ssub.s32 1, %s6
  %s9 = scalar_select 0, %s8, %s6
  $region1: #{tpu_custom_call.1} parent=0
    #allocation2 [shape = 'u8[131072]{0}', space=vmem, size = 0x20000, scoped, tag = 'output window, operand 0']
    #allocation3 [shape = 's32[2]{0}', space=sflag, size = 0x8, scoped, tag = 'scoped memory for tpu_custom_call.1']
    %10 = vsyncpa [#allocation3], 0
    %s11 = scalar_lea.sflag [#allocation3], 1
    %12 = vsyncpa %s11, 0
    loop: start=0, step=1, limit=4
    $region2: #{tpu_custom_call.1} parent=1 // loop_pre_header
      _
    $region3: #{tpu_custom_call.1} parent=1 // loop_header
      %s14 = sphi 0, %s18
      %p15 = scmp.ge.s32.totalorder %s14, 4
      %s24 = sphi 0, %s26
      %s27 = sphi 0, %s24
      %s28 = sphi 0, %s27
      %s44 = sphi 0, %s28
      %s50 = sphi 0, %s52
      %s53 = sphi 0, %s50
      %s54 = sphi 0, %s53
      %s70 = sphi 0, %s54
      %s74 = sphi 0, %s74
      %s76 = sphi 0, %s74
      %s77 = sphi 0, %s76
      %s91 = sphi 0, %s77
      %s95 = sphi 0, %s95
      %s97 = sphi 0, %s95
      %s98 = sphi 0, %s97
      %s112 = sphi 0, %s98
      %s116 = sphi 0, %s116
      %s118 = sphi 0, %s116
      %s119 = sphi 0, %s118
      %s133 = sphi 0, %s119
      %s139 = sphi 0, %s141
      %s142 = sphi 0, %s139
      %s143 = sphi 0, %s142
      %s159 = sphi 0, %s143
    $region4: #{tpu_custom_call.1} parent=1 // loop_header_branch
      %17 = sbr.rel (%p15) target = $region8
    $region5: #{tpu_custom_call.1} parent=1 // loop_body
      %s19 = ssub.s32 %s14, 1
      %s20 = ssub.s32 %s14, 2
      %s21 = sadd.s32 %s14, 1
      %s22 = ssub.s32 %s14, %s21
      %p23 = scmp.eq.s32.totalorder %s22, 0
      %s25 = sadd.s32 %s24, 1
      %s26 = scalar_select %p23, %s24, %s25
      %p29 = pneg %p23
      %p30 = scmp.eq.s32.totalorder %s14, 1
      %p31 = por %p29, %p30
      %p32 = scmp.ne.s32.totalorder %s24, %s27
      %p33 = scmp.eq.s32.totalorder %s14, 0
      %p34 = por %p32, %p33
      %p35 = scmp.ne.s32.totalorder %s24, %s27
      %p36 = scmp.eq.s32.totalorder %s19, 1
      %p37 = por %p35, %p36
      %p38 = scmp.ne.s32.totalorder %s27, %s28
      %p39 = scmp.eq.s32.totalorder %s19, 0
      %p40 = por %p38, %p39
      %p41 = scmp.ne.s32.totalorder %s27, %s28
      %p42 = scmp.eq.s32.totalorder %s20, 1
      %p43 = por %p41, %p42
      %p45 = scmp.ne.s32.totalorder %s28, %s44
      %p46 = scmp.eq.s32.totalorder %s20, 0
      %p47 = por %p45, %p46
      %s48 = ssub.s32 %s14, %s21
      %p49 = scmp.eq.s32.totalorder %s48, 0
      %s51 = sadd.s32 %s50, 1
      %s52 = scalar_select %p49, %s50, %s51
      %p55 = pneg %p49
      %p56 = scmp.eq.s32.totalorder %s14, 1
      %p57 = por %p55, %p56
      %p58 = scmp.ne.s32.totalorder %s50, %s53
      %p59 = scmp.eq.s32.totalorder %s14, 0
      %p60 = por %p58, %p59
      %p61 = scmp.ne.s32.totalorder %s50, %s53
      %p62 = scmp.eq.s32.totalorder %s19, 1
      %p63 = por %p61, %p62
      %p64 = scmp.ne.s32.totalorder %s53, %s54
      %p65 = scmp.eq.s32.totalorder %s19, 0
      %p66 = por %p64, %p65
      %p67 = scmp.ne.s32.totalorder %s53, %s54
      %p68 = scmp.eq.s32.totalorder %s20, 1
      %p69 = por %p67, %p68
      %p71 = scmp.ne.s32.totalorder %s54, %s70
      %p72 = scmp.eq.s32.totalorder %s20, 0
      %p73 = por %p71, %p72
      %s75 = sadd.s32 %s74, 1
      %p78 = scmp.eq.s32.totalorder %s14, 1
      %p79 = scmp.ne.s32.totalorder %s74, %s76
      %p80 = scmp.eq.s32.totalorder %s14, 0
      %p81 = por %p79, %p80
      %p82 = scmp.ne.s32.totalorder %s74, %s76
      %p83 = scmp.eq.s32.totalorder %s19, 1
      %p84 = por %p82, %p83
      %p85 = scmp.ne.s32.totalorder %s76, %s77
      %p86 = scmp.eq.s32.totalorder %s19, 0
      %p87 = por %p85, %p86
      %p88 = scmp.ne.s32.totalorder %s76, %s77
      %p89 = scmp.eq.s32.totalorder %s20, 1
      %p90 = por %p88, %p89
      %p92 = scmp.ne.s32.totalorder %s77, %s91
      %p93 = scmp.eq.s32.totalorder %s20, 0
      %p94 = por %p92, %p93
      %s96 = sadd.s32 %s95, 1
      %p99 = scmp.eq.s32.totalorder %s14, 1
      %p100 = scmp.ne.s32.totalorder %s95, %s97
      %p101 = scmp.eq.s32.totalorder %s14, 0
      %p102 = por %p100, %p101
      %p103 = scmp.ne.s32.totalorder %s95, %s97
      %p104 = scmp.eq.s32.totalorder %s19, 1
      %p105 = por %p103, %p104
      %p106 = scmp.ne.s32.totalorder %s97, %s98
      %p107 = scmp.eq.s32.totalorder %s19, 0
      %p108 = por %p106, %p107
      %p109 = scmp.ne.s32.totalorder %s97, %s98
      %p110 = scmp.eq.s32.totalorder %s20, 1
      %p111 = por %p109, %p110
      %p113 = scmp.ne.s32.totalorder %s98, %s112
      %p114 = scmp.eq.s32.totalorder %s20, 0
      %p115 = por %p113, %p114
      %s117 = sadd.s32 %s116, 1
      %p120 = scmp.eq.s32.totalorder %s14, 1
      %p121 = scmp.ne.s32.totalorder %s116, %s118
      %p122 = scmp.eq.s32.totalorder %s14, 0
      %p123 = por %p121, %p122
      %p124 = scmp.ne.s32.totalorder %s116, %s118
      %p125 = scmp.eq.s32.totalorder %s19, 1
      %p126 = por %p124, %p125
      %p127 = scmp.ne.s32.totalorder %s118, %s119
      %p128 = scmp.eq.s32.totalorder %s19, 0
      %p129 = por %p127, %p128
      %p130 = scmp.ne.s32.totalorder %s118, %s119
      %p131 = scmp.eq.s32.totalorder %s20, 1
      %p132 = por %p130, %p131
      %p134 = scmp.ne.s32.totalorder %s119, %s133
      %p135 = scmp.eq.s32.totalorder %s20, 0
      %p136 = por %p134, %p135
      %s137 = ssub.s32 %s14, %s21
      %p138 = scmp.eq.s32.totalorder %s137, 0
      %s140 = sadd.s32 %s139, 1
      %s141 = scalar_select %p138, %s139, %s140
      %p144 = pneg %p138
      %p145 = scmp.eq.s32.totalorder %s14, 1
      %p146 = por %p144, %p145
      %p147 = scmp.ne.s32.totalorder %s139, %s142
      %p148 = scmp.eq.s32.totalorder %s14, 0
      %p149 = por %p147, %p148
      %p150 = scmp.ne.s32.totalorder %s139, %s142
      %p151 = scmp.eq.s32.totalorder %s19, 1
      %p152 = por %p150, %p151
      %p153 = scmp.ne.s32.totalorder %s142, %s143
      %p154 = scmp.eq.s32.totalorder %s19, 0
      %p155 = por %p153, %p154
      %p156 = scmp.ne.s32.totalorder %s142, %s143
      %p157 = scmp.eq.s32.totalorder %s20, 1
      %p158 = por %p156, %p157
      %p160 = scmp.ne.s32.totalorder %s143, %s159
      %p161 = scmp.eq.s32.totalorder %s20, 0
      %p162 = por %p160, %p161
      %p163 = scmp.le.s32.totalorder 1, %s14
      %p164 = scmp.lt.s32.totalorder %s14, 3
      %p165 = pnand %p163, %p164
      %p166 = pneg %p165
      // Predicated region
      $region9: #{tpu_custom_call.1} parent=5 // pred_check
        _
      $region10: #{tpu_custom_call.1} parent=5 // pred_check_branch
        %168 = sbr.rel (%p165) target = $region12
      $region11: #{tpu_custom_call.1} parent=5 // pred_region
        %s169 = ssub.s32 %s14, 1
        // Predicated region
        $region13: #{tpu_custom_call.1} parent=11 // pred_check
          %p170 = pneg %p87
        $region14: #{tpu_custom_call.1} parent=11 // pred_check_branch
          %172 = sbr.rel (%p170) target = $region16
        $region15: #{tpu_custom_call.1} parent=11 // pred_region
          _
        $region16: #{tpu_custom_call.1} parent=11 // pred_fallthru
          _
        // Predicated region
        $region17: #{tpu_custom_call.1} parent=11 // pred_check
          %p173 = pneg %p108
        $region18: #{tpu_custom_call.1} parent=11 // pred_check_branch
          %175 = sbr.rel (%p173) target = $region20
        $region19: #{tpu_custom_call.1} parent=11 // pred_region
          _
        $region20: #{tpu_custom_call.1} parent=11 // pred_fallthru
          _
        // Predicated region
        $region21: #{tpu_custom_call.1} parent=11 // pred_check
          %p176 = pneg %p129
        $region22: #{tpu_custom_call.1} parent=11 // pred_check_branch
          %178 = sbr.rel (%p176) target = $region24
        $region23: #{tpu_custom_call.1} parent=11 // pred_region
          _
        $region24: #{tpu_custom_call.1} parent=11 // pred_fallthru
          _
      $region12: #{tpu_custom_call.1} parent=5 // pred_fallthru
        _
      %p179 = scmp.lt.s32.totalorder %s14, 2
      // Predicated region
      $region25: #{tpu_custom_call.1} parent=5 // pred_check
        %p180 = pneg %p179
      $region26: #{tpu_custom_call.1} parent=5 // pred_check_branch
        %182 = sbr.rel (%p180) target = $region28
      $region27: #{tpu_custom_call.1} parent=5 // pred_region
        // Predicated region
        $region29: #{tpu_custom_call.1} parent=27 // pred_check
          %p183 = pneg %p34
        $region30: #{tpu_custom_call.1} parent=27 // pred_check_branch
          %185 = sbr.rel (%p183) target = $region32
        $region31: #{tpu_custom_call.1} parent=27 // pred_region
          %p186 = scmp.lt.s32.totalorder %s14, 1
          %s187 = scalar_select %p186, %s14, 1
          %s188 = smul.addr %s187, 2
          %s189 = scalar_lea.vmem %s0, %s188
        $region32: #{tpu_custom_call.1} parent=27 // pred_fallthru
          _
        // Predicated region
        $region33: #{tpu_custom_call.1} parent=27 // pred_check
          %p190 = pneg %p60
        $region34: #{tpu_custom_call.1} parent=27 // pred_check_branch
          %192 = sbr.rel (%p190) target = $region36
        $region35: #{tpu_custom_call.1} parent=27 // pred_region
          %s193 = smul.u32 16, %s14
          %p194 = scmp.lt.s32.totalorder %s193, 31
          %s195 = scalar_select %p194, %s193, 31
          %s196 = smul.addr %s195, 8
          %s197 = scalar_lea.vmem %s1, %s196
          %s198 = smul.u32 16, %s14
        $region36: #{tpu_custom_call.1} parent=27 // pred_fallthru
          _
      $region28: #{tpu_custom_call.1} parent=5 // pred_fallthru
        _
      %p199 = scmp.le.s32.totalorder 1, %s14
      %p200 = scmp.lt.s32.totalorder %s14, 3
      %p201 = pnand %p199, %p200
      %p202 = pneg %p201
      // Predicated region
      $region37: #{tpu_custom_call.1} parent=5 // pred_check
        _
      $region38: #{tpu_custom_call.1} parent=5 // pred_check_branch
        %204 = sbr.rel (%p201) target = $region40
      $region39: #{tpu_custom_call.1} parent=5 // pred_region
        %s205 = ssub.s32 %s14, 1
        %p206 = scmp.lt.s32.totalorder %s19, 1
        %s207 = scalar_select %p206, %s19, 1
        %s208 = smul.addr %s207, 2
        %s209 = scalar_lea.vmem %s0, %s208
        %p210 = pneg %p40
        %p211 = pneg %p37
        %s212 = smul.u32 16, %s19
        %p213 = scmp.lt.s32.totalorder %s212, 31
        %s214 = scalar_select %p213, %s212, 31
        %s215 = smul.addr %s214, 8
        %s216 = scalar_lea.vmem %s1, %s215
        %p217 = pneg %p66
        %p218 = pneg %p63
        %p219 = pneg %p87
        %p220 = pneg %p84
        %p221 = pneg %p108
        %p222 = pneg %p105
        %p223 = pneg %p129
        %p224 = pneg %p126
        %p225 = pneg %p155
        %p226 = pneg %p152
        %s227 = sand.u32 %s142, 1
        %s228 = scalar_lea.sflag [#allocation3], %s227
        %s229 = sand.u32 %s142, 1
        %s230 = smul.addr %s229, 128
        %s231 = scalar_lea.vmem [#allocation2], %s230
        %p232 = scmp.lt.s32.totalorder %s19, 1
        %s233 = scalar_select %p232, %s19, 1
        %s234 = smul.addr %s233, 2
        %s235 = scalar_lea.vmem %s0, %s234
        %s236 = smul.u32 16, %s19
        %p237 = scmp.lt.s32.totalorder %s236, 31
        %s238 = scalar_select %p237, %s236, 31
        %s239 = smul.addr %s238, 8
        %s240 = scalar_lea.vmem %s1, %s239
        %s241 = smul.u32 16, %s19
        %s242 = smul.u32 16, %s19
        %v243 = vld [vmem:[%s235] sm:$0x3]
        %v244 = vlaneseq
        %v245 = vshrl.u32 %v244, 7
        %v246 = vadd.s32 %v245, 8
        %v247 = vadd.s32 %v245, 16
        %v248 = vadd.s32 %v245, 24
        %v249 = vadd.s32 %v245, 32
        %v250 = vadd.s32 %v245, 40
        %v251 = vadd.s32 %v245, 48
        %v252 = vadd.s32 %v245, 56
        %v253 = vadd.s32 %v245, 64
        %v254 = vadd.s32 %v245, 72
        %v255 = vadd.s32 %v245, 80
        %v256 = vadd.s32 %v245, 88
        %v257 = vadd.s32 %v245, 96
        %v258 = vadd.s32 %v245, 104
        %v259 = vadd.s32 %v245, 112
        %v260 = vadd.s32 %v245, 120
        %v261 = vperm.slane %v243, 0
        %vm262 = vcmp.eq.s32.totalorder %v261, %v245
        %vm263 = vcmp.eq.s32.totalorder %v261, %v246
        %vm264 = vcmp.eq.s32.totalorder %v261, %v247
        %vm265 = vcmp.eq.s32.totalorder %v261, %v248
        %vm266 = vcmp.eq.s32.totalorder %v261, %v249
        %vm267 = vcmp.eq.s32.totalorder %v261, %v250
        %vm268 = vcmp.eq.s32.totalorder %v261, %v251
        %vm269 = vcmp.eq.s32.totalorder %v261, %v252
        %vm270 = vcmp.eq.s32.totalorder %v261, %v253
        %vm271 = vcmp.eq.s32.totalorder %v261, %v254
        %vm272 = vcmp.eq.s32.totalorder %v261, %v255
        %vm273 = vcmp.eq.s32.totalorder %v261, %v256
        %vm274 = vcmp.eq.s32.totalorder %v261, %v257
        %vm275 = vcmp.eq.s32.totalorder %v261, %v258
        %vm276 = vcmp.eq.s32.totalorder %v261, %v259
        %vm277 = vcmp.eq.s32.totalorder %v261, %v260
        %v278 = vsel %vm262, 1, 0
        %v279 = vsel %vm263, 1, 0
        %v280 = vsel %vm264, 1, 0
        %v281 = vsel %vm265, 1, 0
        %v282 = vsel %vm266, 1, 0
        %v283 = vsel %vm267, 1, 0
        %v284 = vsel %vm268, 1, 0
        %v285 = vsel %vm269, 1, 0
        %v286 = vsel %vm270, 1, 0
        %v287 = vsel %vm271, 1, 0
        %v288 = vsel %vm272, 1, 0
        %v289 = vsel %vm273, 1, 0
        %v290 = vsel %vm274, 1, 0
        %v291 = vsel %vm275, 1, 0
        %v292 = vsel %vm276, 1, 0
        %v293 = vsel %vm277, 1, 0
        %v294 = vcvt.s32.f32 %v278
        %v295 = vcvt.s32.f32 %v279
        %v296 = vcvt.s32.f32 %v280
        %v297 = vcvt.s32.f32 %v281
        %v298 = vcvt.s32.f32 %v282
        %v299 = vcvt.s32.f32 %v283
        %v300 = vcvt.s32.f32 %v284
        %v301 = vcvt.s32.f32 %v285
        %v302 = vcvt.s32.f32 %v286
        %v303 = vcvt.s32.f32 %v287
        %v304 = vcvt.s32.f32 %v288
        %v305 = vcvt.s32.f32 %v289
        %v306 = vcvt.s32.f32 %v290
        %v307 = vcvt.s32.f32 %v291
        %v308 = vcvt.s32.f32 %v292
        %v309 = vcvt.s32.f32 %v293
        %v310 = vperm.slane %v243, 1
        %vm311 = vcmp.eq.s32.totalorder %v310, %v245
        %vm312 = vcmp.eq.s32.totalorder %v310, %v246
        %vm313 = vcmp.eq.s32.totalorder %v310, %v247
        %vm314 = vcmp.eq.s32.totalorder %v310, %v248
        %vm315 = vcmp.eq.s32.totalorder %v310, %v249
        %vm316 = vcmp.eq.s32.totalorder %v310, %v250
        %vm317 = vcmp.eq.s32.totalorder %v310, %v251
        %vm318 = vcmp.eq.s32.totalorder %v310, %v252
        %vm319 = vcmp.eq.s32.totalorder %v310, %v253
        %vm320 = vcmp.eq.s32.totalorder %v310, %v254
        %vm321 = vcmp.eq.s32.totalorder %v310, %v255
        %vm322 = vcmp.eq.s32.totalorder %v310, %v256
        %vm323 = vcmp.eq.s32.totalorder %v310, %v257
        %vm324 = vcmp.eq.s32.totalorder %v310, %v258
        %vm325 = vcmp.eq.s32.totalorder %v310, %v259
        %vm326 = vcmp.eq.s32.totalorder %v310, %v260
        %v327 = vsel %vm311, 1, 0
        %v328 = vsel %vm312, 1, 0
        %v329 = vsel %vm313, 1, 0
        %v330 = vsel %vm314, 1, 0
        %v331 = vsel %vm315, 1, 0
        %v332 = vsel %vm316, 1, 0
        %v333 = vsel %vm317, 1, 0
        %v334 = vsel %vm318, 1, 0
        %v335 = vsel %vm319, 1, 0
        %v336 = vsel %vm320, 1, 0
        %v337 = vsel %vm321, 1, 0
        %v338 = vsel %vm322, 1, 0
        %v339 = vsel %vm323, 1, 0
        %v340 = vsel %vm324, 1, 0
        %v341 = vsel %vm325, 1, 0
        %v342 = vsel %vm326, 1, 0
        %v343 = vcvt.s32.f32 %v327
        %v344 = vcvt.s32.f32 %v328
        %v345 = vcvt.s32.f32 %v329
        %v346 = vcvt.s32.f32 %v330
        %v347 = vcvt.s32.f32 %v331
        %v348 = vcvt.s32.f32 %v332
        %v349 = vcvt.s32.f32 %v333
        %v350 = vcvt.s32.f32 %v334
        %v351 = vcvt.s32.f32 %v335
        %v352 = vcvt.s32.f32 %v336
        %v353 = vcvt.s32.f32 %v337
        %v354 = vcvt.s32.f32 %v338
        %v355 = vcvt.s32.f32 %v339
        %v356 = vcvt.s32.f32 %v340
        %v357 = vcvt.s32.f32 %v341
        %v358 = vcvt.s32.f32 %v342
        %v359 = vadd.f32 %v294, %v343
        %v360 = vadd.f32 %v295, %v344
        %v361 = vadd.f32 %v296, %v345
        %v362 = vadd.f32 %v297, %v346
        %v363 = vadd.f32 %v298, %v347
        %v364 = vadd.f32 %v299, %v348
        %v365 = vadd.f32 %v300, %v349
        %v366 = vadd.f32 %v301, %v350
        %v367 = vadd.f32 %v302, %v351
        %v368 = vadd.f32 %v303, %v352
        %v369 = vadd.f32 %v304, %v353
        %v370 = vadd.f32 %v305, %v354
        %v371 = vadd.f32 %v306, %v355
        %v372 = vadd.f32 %v307, %v356
        %v373 = vadd.f32 %v308, %v357
        %v374 = vadd.f32 %v309, %v358
        %v375 = vld [vmem:[%s2] sm:$0xff]
        %v376 = vld [vmem:[%s2 + $0x8] sm:$0xff]
        %v377 = vld [vmem:[%s2 + $0x10] sm:$0xff]
        %v378 = vld [vmem:[%s2 + $0x18] sm:$0xff]
        %v379 = vld [vmem:[%s2 + $0x20] sm:$0xff]
        %v380 = vld [vmem:[%s2 + $0x28] sm:$0xff]
        %v381 = vld [vmem:[%s2 + $0x30] sm:$0xff]
        %v382 = vld [vmem:[%s2 + $0x38] sm:$0xff]
        %v383 = vld [vmem:[%s2 + $0x40] sm:$0xff]
        %v384 = vld [vmem:[%s2 + $0x48] sm:$0xff]
        %v385 = vld [vmem:[%s2 + $0x50] sm:$0xff]
        %v386 = vld [vmem:[%s2 + $0x58] sm:$0xff]
        %v387 = vld [vmem:[%s2 + $0x60] sm:$0xff]
        %v388 = vld [vmem:[%s2 + $0x68] sm:$0xff]
        %v389 = vld [vmem:[%s2 + $0x70] sm:$0xff]
        %v390 = vld [vmem:[%s2 + $0x78] sm:$0xff]
        %391 = vxpose.xlu0.b32.start [1/16] %v359, 128
        %392 = vxpose.xlu0.b32.cont [2/16] %v360, 128
        %393 = vxpose.xlu0.b32.cont [3/16] %v361, 128
        %394 = vxpose.xlu0.b32.cont [4/16] %v362, 128
        %395 = vxpose.xlu0.b32.cont [5/16] %v363, 128
        %396 = vxpose.xlu0.b32.cont [6/16] %v364, 128
        %397 = vxpose.xlu0.b32.cont [7/16] %v365, 128
        %398 = vxpose.xlu0.b32.cont [8/16] %v366, 128
        %399 = vxpose.xlu0.b32.cont [9/16] %v367, 128
        %400 = vxpose.xlu0.b32.cont [10/16] %v368, 128
        %401 = vxpose.xlu0.b32.cont [11/16] %v369, 128
        %402 = vxpose.xlu0.b32.cont [12/16] %v370, 128
        %403 = vxpose.xlu0.b32.cont [13/16] %v371, 128
        %404 = vxpose.xlu0.b32.cont [14/16] %v372, 128
        %405 = vxpose.xlu0.b32.cont [15/16] %v373, 128
        %406 = vxpose.xlu0.b32.end [16/16] %v374, 128
        %v407 = vpop.trf.xlu0
        %v408 = vpop.trf.xlu0
        %v409 = vpop.trf.xlu0
        %v410 = vpop.trf.xlu0
        %v411 = vpop.trf.xlu0
        %v412 = vpop.trf.xlu0
        %v413 = vpop.trf.xlu0
        %v414 = vpop.trf.xlu0
        %v415 = vpop.trf.xlu0
        %v416 = vpop.trf.xlu0
        %v417 = vpop.trf.xlu0
        %v418 = vpop.trf.xlu0
        %v419 = vpop.trf.xlu0
        %v420 = vpop.trf.xlu0
        %v421 = vpop.trf.xlu0
        %v422 = vpop.trf.xlu0
        %423 = vmatpush.msra.mxu0 %v390
        %424 = vmatpush.msra.mxu0 %v389
        %425 = vmatpush.msra.mxu0 %v388
        %426 = vmatpush.msra.mxu0 %v387
        %427 = vmatpush.msra.mxu0 %v386
        %428 = vmatpush.msra.mxu0 %v385
        %429 = vmatpush.msra.mxu0 %v384
        %430 = vmatpush.msra.mxu0 %v383
        %431 = vmatpush.msra.mxu0 %v382
        %432 = vmatpush.msra.mxu0 %v381
        %433 = vmatpush.msra.mxu0 %v380
        %434 = vmatpush.msra.mxu0 %v379
        %435 = vmatpush.msra.mxu0 %v378
        %436 = vmatpush.msra.mxu0 %v377
        %437 = vmatpush.msra.mxu0 %v376
        %438 = vmatpush.msra.mxu0 %v375
        %439 = vmatmul.f32.gmra.mxu0 %v407
        %v440 = vpop.f32.mrf.mxu0
        %v441 = vadd.f32 0.0, %v440
        %442 = vmatmul.f32.gmra.mxu0 %v408
        %v443 = vpop.f32.mrf.mxu0
        %v444 = vadd.f32 0.0, %v443
        %445 = vmatmul.f32.gmra.mxu0 %v409
        %v446 = vpop.f32.mrf.mxu0
        %v447 = vadd.f32 0.0, %v446
        %448 = vmatmul.f32.gmra.mxu0 %v410
        %v449 = vpop.f32.mrf.mxu0
        %v450 = vadd.f32 0.0, %v449
        %451 = vmatmul.f32.gmra.mxu0 %v411
        %v452 = vpop.f32.mrf.mxu0
        %v453 = vadd.f32 0.0, %v452
        %454 = vmatmul.f32.gmra.mxu0 %v412
        %v455 = vpop.f32.mrf.mxu0
        %v456 = vadd.f32 0.0, %v455
        %457 = vmatmul.f32.gmra.mxu0 %v413
        %v458 = vpop.f32.mrf.mxu0
        %v459 = vadd.f32 0.0, %v458
        %460 = vmatmul.f32.gmra.mxu0 %v414
        %v461 = vpop.f32.mrf.mxu0
        %v462 = vadd.f32 0.0, %v461
        %463 = vmatmul.f32.gmra.mxu0 %v415
        %v464 = vpop.f32.mrf.mxu0
        %v465 = vadd.f32 0.0, %v464
        %466 = vmatmul.f32.gmra.mxu0 %v416
        %v467 = vpop.f32.mrf.mxu0
        %v468 = vadd.f32 0.0, %v467
        %469 = vmatmul.f32.gmra.mxu0 %v417
        %v470 = vpop.f32.mrf.mxu0
        %v471 = vadd.f32 0.0, %v470
        %472 = vmatmul.f32.gmra.mxu0 %v418
        %v473 = vpop.f32.mrf.mxu0
        %v474 = vadd.f32 0.0, %v473
        %475 = vmatmul.f32.gmra.mxu0 %v419
        %v476 = vpop.f32.mrf.mxu0
        %v477 = vadd.f32 0.0, %v476
        %478 = vmatmul.f32.gmra.mxu0 %v420
        %v479 = vpop.f32.mrf.mxu0
        %v480 = vadd.f32 0.0, %v479
        %481 = vmatmul.f32.gmra.mxu0 %v421
        %v482 = vpop.f32.mrf.mxu0
        %v483 = vadd.f32 0.0, %v482
        %484 = vmatmul.f32.gmra.mxu0 %v422
        %v485 = vpop.f32.mrf.mxu0
        %v486 = vadd.f32 0.0, %v485
        %487 = vdwg.mxu0
        %v488 = vld [vmem:[%s240] sm:$0xff]
        %v489 = vld [vmem:[%s240 + $0x8] sm:$0xff]
        %v490 = vld [vmem:[%s240 + $0x10] sm:$0xff]
        %v491 = vld [vmem:[%s240 + $0x18] sm:$0xff]
        %v492 = vld [vmem:[%s240 + $0x20] sm:$0xff]
        %v493 = vld [vmem:[%s240 + $0x28] sm:$0xff]
        %v494 = vld [vmem:[%s240 + $0x30] sm:$0xff]
        %v495 = vld [vmem:[%s240 + $0x38] sm:$0xff]
        %v496 = vld [vmem:[%s240 + $0x40] sm:$0xff]
        %v497 = vld [vmem:[%s240 + $0x48] sm:$0xff]
        %v498 = vld [vmem:[%s240 + $0x50] sm:$0xff]
        %v499 = vld [vmem:[%s240 + $0x58] sm:$0xff]
        %v500 = vld [vmem:[%s240 + $0x60] sm:$0xff]
        %v501 = vld [vmem:[%s240 + $0x68] sm:$0xff]
        %v502 = vld [vmem:[%s240 + $0x70] sm:$0xff]
        %v503 = vld [vmem:[%s240 + $0x78] sm:$0xff]
        %v504 = vld [vmem:[%s3] sm:$0xff]
        %v505 = vld [vmem:[%s3 + $0x8] sm:$0xff]
        %v506 = vld [vmem:[%s3 + $0x10] sm:$0xff]
        %v507 = vld [vmem:[%s3 + $0x18] sm:$0xff]
        %v508 = vld [vmem:[%s4] sm:$0x1]
        %v510 = vperm.slane %v508, 0
        %vm512 = vcmask 261120
        %v514 = vsel %vm512, %v488, 0
        %v517 = vsel %vm512, %v489, 0
        %v520 = vsel %vm512, %v490, 0
        %v523 = vsel %vm512, %v491, 0
        %v526 = vsel %vm512, %v492, 0
        %v529 = vsel %vm512, %v493, 0
        %v532 = vsel %vm512, %v494, 0
        %v535 = vsel %vm512, %v495, 0
        %v538 = vsel %vm512, %v496, 0
        %v541 = vsel %vm512, %v497, 0
        %v544 = vsel %vm512, %v498, 0
        %v547 = vsel %vm512, %v499, 0
        %v550 = vsel %vm512, %v500, 0
        %v553 = vsel %vm512, %v501, 0
        %v556 = vsel %vm512, %v502, 0
        %v559 = vsel %vm512, %v503, 0
        %561 = vmatpush.msra.mxu0 0.0
        %562 = vmatpush.msra.mxu0 0.0
        %563 = vmatpush.msra.mxu0 0.0
        %564 = vmatpush.msra.mxu0 0.0
        %565 = vmatpush.msra.mxu0 0.0
        %566 = vmatpush.msra.mxu0 0.0
        %567 = vmatpush.msra.mxu0 0.0
        %568 = vmatpush.msra.mxu0 0.0
        %569 = vmatpush.msra.mxu0 0.0
        %570 = vmatpush.msra.mxu0 0.0
        %571 = vmatpush.msra.mxu0 0.0
        %572 = vmatpush.msra.mxu0 0.0
        %573 = vmatpush.msra.mxu0 %v507
        %574 = vmatpush.msra.mxu0 %v506
        %575 = vmatpush.msra.mxu0 %v505
        %576 = vmatpush.msra.mxu0 %v504
        %577 = vmatmul.f32.gmra.mxu0 %v514
        %v578 = vpop.f32.mrf.mxu0
        %v579 = vadd.f32 %v510, %v578
        %580 = vmatmul.f32.gmra.mxu0 %v517
        %v581 = vpop.f32.mrf.mxu0
        %v582 = vadd.f32 %v510, %v581
        %583 = vmatmul.f32.gmra.mxu0 %v520
        %v584 = vpop.f32.mrf.mxu0
        %v585 = vadd.f32 %v510, %v584
        %586 = vmatmul.f32.gmra.mxu0 %v523
        %v587 = vpop.f32.mrf.mxu0
        %v588 = vadd.f32 %v510, %v587
        %589 = vmatmul.f32.gmra.mxu0 %v526
        %v590 = vpop.f32.mrf.mxu0
        %v591 = vadd.f32 %v510, %v590
        %592 = vmatmul.f32.gmra.mxu0 %v529
        %v593 = vpop.f32.mrf.mxu0
        %v594 = vadd.f32 %v510, %v593
        %595 = vmatmul.f32.gmra.mxu0 %v532
        %v596 = vpop.f32.mrf.mxu0
        %v597 = vadd.f32 %v510, %v596
        %598 = vmatmul.f32.gmra.mxu0 %v535
        %v599 = vpop.f32.mrf.mxu0
        %v600 = vadd.f32 %v510, %v599
        %601 = vmatmul.f32.gmra.mxu0 %v538
        %v602 = vpop.f32.mrf.mxu0
        %v603 = vadd.f32 %v510, %v602
        %604 = vmatmul.f32.gmra.mxu0 %v541
        %v605 = vpop.f32.mrf.mxu0
        %v606 = vadd.f32 %v510, %v605
        %607 = vmatmul.f32.gmra.mxu0 %v544
        %v608 = vpop.f32.mrf.mxu0
        %v609 = vadd.f32 %v510, %v608
        %610 = vmatmul.f32.gmra.mxu0 %v547
        %v611 = vpop.f32.mrf.mxu0
        %v612 = vadd.f32 %v510, %v611
        %613 = vmatmul.f32.gmra.mxu0 %v550
        %v614 = vpop.f32.mrf.mxu0
        %v615 = vadd.f32 %v510, %v614
        %616 = vmatmul.f32.gmra.mxu0 %v553
        %v617 = vpop.f32.mrf.mxu0
        %v618 = vadd.f32 %v510, %v617
        %619 = vmatmul.f32.gmra.mxu0 %v556
        %v620 = vpop.f32.mrf.mxu0
        %v621 = vadd.f32 %v510, %v620
        %622 = vmatmul.f32.gmra.mxu0 %v559
        %v623 = vpop.f32.mrf.mxu0
        %v624 = vadd.f32 %v510, %v623
        %625 = vdwg.mxu0
        %v626 = vmul.f32 %v441, %v579
        %v627 = vmul.f32 %v444, %v582
        %v628 = vmul.f32 %v447, %v585
        %v629 = vmul.f32 %v450, %v588
        %v630 = vmul.f32 %v453, %v591
        %v631 = vmul.f32 %v456, %v594
        %v632 = vmul.f32 %v459, %v597
        %v633 = vmul.f32 %v462, %v600
        %v634 = vmul.f32 %v465, %v603
        %v635 = vmul.f32 %v468, %v606
        %v636 = vmul.f32 %v471, %v609
        %v637 = vmul.f32 %v474, %v612
        %v638 = vmul.f32 %v477, %v615
        %v639 = vmul.f32 %v480, %v618
        %v640 = vmul.f32 %v483, %v621
        %v641 = vmul.f32 %v486, %v624
        %642 = vst [vmem:[%s231] sm:$0xff] %v626
        %643 = vst [vmem:[%s231 + $0x8] sm:$0xff] %v627
        %644 = vst [vmem:[%s231 + $0x10] sm:$0xff] %v628
        %645 = vst [vmem:[%s231 + $0x18] sm:$0xff] %v629
        %646 = vst [vmem:[%s231 + $0x20] sm:$0xff] %v630
        %647 = vst [vmem:[%s231 + $0x28] sm:$0xff] %v631
        %648 = vst [vmem:[%s231 + $0x30] sm:$0xff] %v632
        %649 = vst [vmem:[%s231 + $0x38] sm:$0xff] %v633
        %650 = vst [vmem:[%s231 + $0x40] sm:$0xff] %v634
        %651 = vst [vmem:[%s231 + $0x48] sm:$0xff] %v635
        %652 = vst [vmem:[%s231 + $0x50] sm:$0xff] %v636
        %653 = vst [vmem:[%s231 + $0x58] sm:$0xff] %v637
        %654 = vst [vmem:[%s231 + $0x60] sm:$0xff] %v638
        %655 = vst [vmem:[%s231 + $0x68] sm:$0xff] %v639
        %656 = vst [vmem:[%s231 + $0x70] sm:$0xff] %v640
        %657 = vst [vmem:[%s231 + $0x78] sm:$0xff] %v641
        %s658 = sand.u32 %s142, 1
        %s659 = scalar_lea.sflag [#allocation3], %s658
        %s660 = sand.u32 %s142, 1
        %s661 = smul.addr %s660, 128
        %s662 = scalar_lea.vmem [#allocation2], %s661
        // Predicated region
        $region41: #{tpu_custom_call.1} parent=39 // pred_check
          %p663 = pneg %p152
        $region42: #{tpu_custom_call.1} parent=39 // pred_check_branch
          %665 = sbr.rel (%p663) target = $region44
        $region43: #{tpu_custom_call.1} parent=39 // pred_region
          %s666 = smul.u32 16, %s19
          %668 = vsyncadd %s659, 0
          %s669 = smul.addr %s666, 8
          %s670 = scalar_lea.hbm %s5, %s669
          %s671 = sshll.u32 %s662, 4
          %s672 = int_to_ptr.vmem [resolvable:$true] %s671
          %s673 = sshll.u32 %s670, 4
          %s674 = int_to_ptr.hbm [resolvable:$true] %s673
          %679 = dma.vmem_to_hbm [thread:$0]  %s672, 2048, %s674, %s659, 128, 128, 8
        $region44: #{tpu_custom_call.1} parent=39 // pred_fallthru
          _
      $region40: #{tpu_custom_call.1} parent=5 // pred_fallthru
        _
      %p680 = scmp.le.s32.totalorder 2, %s14
      // Predicated region
      $region45: #{tpu_custom_call.1} parent=5 // pred_check
        %p681 = pneg %p680
      $region46: #{tpu_custom_call.1} parent=5 // pred_check_branch
        %683 = sbr.rel (%p681) target = $region48
      $region47: #{tpu_custom_call.1} parent=5 // pred_region
        %s684 = ssub.s32 %s14, 2
        // Predicated region
        $region49: #{tpu_custom_call.1} parent=47 // pred_check
          %p685 = pneg %p158
        $region50: #{tpu_custom_call.1} parent=47 // pred_check_branch
          %687 = sbr.rel (%p685) target = $region52
        $region51: #{tpu_custom_call.1} parent=47 // pred_region
          %s688 = sand.u32 %s143, 1
          %s689 = scalar_lea.sflag [#allocation3], %s688
          %s690 = sand.u32 %s143, 1
          %s691 = smul.addr %s690, 128
          %s692 = scalar_lea.vmem [#allocation2], %s691
          %694 = dma.done %s689, 2048
        $region52: #{tpu_custom_call.1} parent=47 // pred_fallthru
          _
      $region48: #{tpu_custom_call.1} parent=5 // pred_fallthru
        _
    $region6: #{tpu_custom_call.1} parent=1 // loop_footer
      %s18 = sadd.s32 1, %s14
    $region7: #{tpu_custom_call.1} parent=1 // loop_footer_branch
      %13 = sbr.rel target = $region3
    $region8: #{tpu_custom_call.1} parent=1 // loop_exit
      _
    %695 = vsyncpa [#allocation3], 1
    %s696 = scalar_lea.sflag [#allocation3], 1
    %697 = vsyncpa %s696, 1

</llo_original>
